<compile_context>
chip_gen: v5e
topology: v5e:2x2
jax: 0.10.0
libtpu: 0.0.40
codegen_flags: <defaults>
</compile_context>

<pallas_src>
import jax
import jax.numpy as jnp
from jax.experimental import pallas as pl
from jax.experimental.pallas import tpu as pltpu


def _pair(v):
    return tuple(v) if isinstance(v, (tuple, list)) else (v, v)


def _round_up(x, m):
    return (x + m - 1) // m * m


def _conv_gemm_kernel(p_ref, w_ref, shift_ref, o_ref, acc_ref):
    # p_ref:     (tm, tk)  bf16 im2col patches tile
    # w_ref:     (tk, tn)  bf16 BN-scale-folded weight tile
    # shift_ref: (1,  tn)  f32 folded-BN shift (per output channel)
    # o_ref:     (tm, tn)  f32 output tile
    # acc_ref:   (tm, tn)  f32 VMEM accumulator, resident across the K axis
    @pl.when(pl.program_id(2) == 0)
    def _init():
        # Initialise the accumulator with the BN shift -> no epilogue BN math.
        acc_ref[...] = jnp.broadcast_to(shift_ref[...], acc_ref.shape)

    acc_ref[...] += jnp.dot(p_ref[...], w_ref[...],
                            preferred_element_type=jnp.float32)

    @pl.when(pl.program_id(2) == pl.num_programs(2) - 1)
    def _finalize():
        o_ref[...] = acc_ref[...].astype(o_ref.dtype)


def basic_conv2d_pallas(x_nchw, weight_oihw, gamma, beta,
                        running_mean, running_var, *,
                        stride=1, padding=0, dilation=1, eps=1e-5,
                        compute_dtype=jnp.bfloat16,
                        tm=256, tn=128, tk=128):
    """BasicConv2d forward: BN(conv(x)), bias=False, no ReLU (matches PyTorch forward)."""
    N, Cin, H, W = x_nchw.shape
    Cout, Cin_w, KH, KW = weight_oihw.shape
    assert Cin == Cin_w
    sh, sw = _pair(stride)
    ph, pw = _pair(padding)
    dh, dw = _pair(dilation)

    Ho = (H + 2 * ph - dh * (KH - 1) - 1) // sh + 1
    Wo = (W + 2 * pw - dw * (KW - 1) - 1) // sw + 1
    assert Ho > 0 and Wo > 0
    Hp, Wp = H + 2 * ph, W + 2 * pw
    # Conv windows must stay inside the padded input (review correctness concern).
    assert (KH - 1) * dh + (Ho - 1) * sh + 1 <= Hp
    assert (KW - 1) * dw + (Wo - 1) * sw + 1 <= Wp

    # ---- wrapper-side layout plumbing (data movement only, no conv compute) ----
    # NCHW -> NHWC, spatial zero-pad.
    x = jnp.transpose(x_nchw, (0, 2, 3, 1)).astype(jnp.float32)
    x = jnp.pad(x, ((0, 0), (ph, ph), (pw, pw), (0, 0)))

    # One-shot im2col: (N, Ho, Wo, KH*KW*Cin), tap order [kh, kw, cin].
    taps = []
    for kh in range(KH):
        for kw in range(KW):
            taps.append(x[:, kh * dh: kh * dh + (Ho - 1) * sh + 1: sh,
                            kw * dw: kw * dw + (Wo - 1) * sw + 1: sw, :])
    patches = jnp.concatenate(taps, axis=-1)

    M = N * Ho * Wo
    K = KH * KW * Cin

    tm = min(tm, _round_up(M, 8))
    M_pad = _round_up(M, tm)
    K_pad = _round_up(K, tk)
    Cout_pad = _round_up(Cout, tn)

    patches = patches.reshape(M, K)
    patches = jnp.pad(patches, ((0, M_pad - M), (0, K_pad - K)))
    patches = patches.astype(compute_dtype)

    # Fold BN (inference semantics): scale -> weight, shift kept separate.
    scale = (gamma / jnp.sqrt(running_var + eps)).astype(jnp.float32)
    shift = (beta - running_mean * scale).astype(jnp.float32)

    # (Cout, Cin, KH, KW) -> (KH, KW, Cin, Cout) -> (K, Cout); fold scale; pad to
    # lane-dense (K_pad, Cout_pad); cast once to bf16 for the MXU.
    w = jnp.transpose(weight_oihw.astype(jnp.float32), (2, 3, 1, 0))
    w = w * scale[None, None, None, :]
    w = w.reshape(K, Cout)
    w = jnp.pad(w, ((0, K_pad - K), (0, Cout_pad - Cout))).astype(compute_dtype)

    shift_p = jnp.pad(shift, (0, Cout_pad - Cout)).reshape(1, Cout_pad)

    grid = (M_pad // tm, Cout_pad // tn, K_pad // tk)

    flops = 2 * N * Ho * Wo * Cout * Cin * KH * KW
    bytes_accessed = (patches.size * patches.dtype.itemsize
                      + w.size * w.dtype.itemsize
                      + M_pad * Cout_pad * 4)

    out_pad = pl.pallas_call(
        _conv_gemm_kernel,
        out_shape=jax.ShapeDtypeStruct((M_pad, Cout_pad), jnp.float32),
        grid_spec=pltpu.PrefetchScalarGridSpec(
            num_scalar_prefetch=0,
            grid=grid,
            in_specs=[
                pl.BlockSpec((tm, tk), lambda i, j, k: (i, k)),   # patches
                pl.BlockSpec((tk, tn), lambda i, j, k: (k, j)),   # folded weight
                pl.BlockSpec((1, tn), lambda i, j, k: (0, j)),    # BN shift
            ],
            out_specs=pl.BlockSpec((tm, tn), lambda i, j, k: (i, j)),
            scratch_shapes=[pltpu.VMEM((tm, tn), jnp.float32)],
        ),
        compiler_params=pltpu.CompilerParams(
            dimension_semantics=("parallel", "parallel", "arbitrary")),
        cost_estimate=pl.CostEstimate(flops=flops, transcendentals=0,
                                      bytes_accessed=bytes_accessed),
    )(patches, w, shift_p)

    out = out_pad[:M, :Cout].reshape(N, Ho, Wo, Cout)
    return jnp.transpose(out, (0, 3, 1, 2))   # NHWC -> NCHW (PyTorch convention)


def _reference(x_nchw, weight_oihw, gamma, beta, running_mean, running_var, *,
               stride, padding, dilation, eps=1e-5, compute_dtype=jnp.bfloat16):
    """lax reference mirroring the kernel's quantization (bf16 inputs, f32 accum)."""
    sh, sw = _pair(stride)
    ph, pw = _pair(padding)
    dh, dw = _pair(dilation)
    scale = gamma / jnp.sqrt(running_var + eps)
    shift = beta - running_mean * scale
    w = weight_oihw.astype(jnp.float32) * scale[:, None, None, None]
    y = jax.lax.conv_general_dilated(
        x_nchw.astype(compute_dtype), w.astype(compute_dtype),
        window_strides=(sh, sw),
        padding=[(ph, ph), (pw, pw)],
        rhs_dilation=(dh, dw),
        dimension_numbers=("NCHW", "OIHW", "NCHW"),
        preferred_element_type=jnp.float32)
    return y + shift[None, :, None, None]


if __name__ == "__main__":
    key = jax.random.PRNGKey(0)

    # Small configs exercising the BasicConv2d variants used inside NaMiNet/GCM.
    configs = [
        # (Cin, Cout, kernel, stride, padding, dilation)
        (4, 8, (3, 3), 1, 1, 1),          # plain 3x3
        (4, 8, (1, 3), 1, (0, 1), 1),     # asymmetric 1x3 (GCM branch)
        (4, 8, (3, 3), 1, 3, 3),          # dilated 3x3, dilation=3 (GCM branch)
    ]
    N, H, W = 2, 16, 16

    for idx, (Cin, Cout, ksz, stride, padding, dilation) in enumerate(configs):
        kx, kw_, key = jax.random.split(key, 3)
        KH, KW = _pair(ksz)
        x = jax.random.normal(kx, (N, Cin, H, W), dtype=jnp.float32)
        weight = jax.random.normal(kw_, (Cout, Cin, KH, KW), dtype=jnp.float32) * 0.1

        # Deterministic, non-trivial BN parameters / running stats.
        gamma = jnp.linspace(0.5, 1.5, Cout, dtype=jnp.float32)
        beta = jnp.linspace(-0.2, 0.2, Cout, dtype=jnp.float32)
        running_mean = jnp.linspace(-0.1, 0.1, Cout, dtype=jnp.float32)
        running_var = jnp.linspace(0.8, 1.2, Cout, dtype=jnp.float32)

        out = basic_conv2d_pallas(x, weight, gamma, beta, running_mean, running_var,
                                  stride=stride, padding=padding, dilation=dilation)
        out = jax.block_until_ready(out)

        ref = _reference(x, weight, gamma, beta, running_mean, running_var,
                         stride=stride, padding=padding, dilation=dilation)
        assert out.shape == ref.shape, (idx, out.shape, ref.shape)
        err = jnp.max(jnp.abs(out - ref))
        assert jnp.allclose(out, ref, atol=2e-3, rtol=2e-3), \
            f"config {idx}: mismatch vs lax reference, max abs err = {err}"

    print("KERNEL_OK")
</pallas_src>

<mosaic_0001>
module attributes {stable_mosaic.version = 11 : i64} {
  func.func @_conv_gemm_kernel(%arg0: i32, %arg1: i32, %arg2: i32, %arg3: memref<256x128xbf16, #tpu.memory_space<vmem>>, %arg4: memref<128x128xbf16, #tpu.memory_space<vmem>>, %arg5: memref<1x128xf32, #tpu.memory_space<vmem>>, %arg6: memref<256x128xf32, #tpu.memory_space<vmem>>, %arg7: memref<256x128xf32, #tpu.memory_space<vmem>>) attributes {dimension_semantics = [#tpu.dimension_semantics<parallel>, #tpu.dimension_semantics<parallel>, #tpu.dimension_semantics<arbitrary>], iteration_bounds = array<i64: 2, 1, 1>, scalar_prefetch = 0 : i64, scratch_operands = 1 : i64, tpu.core_type = #tpu.core_type<tc>, window_params = [{transform_indices = @transform_0, window_bounds = array<i64: 256, 128>}, {transform_indices = @transform_1, window_bounds = array<i64: 128, 128>}, {transform_indices = @transform_2, window_bounds = array<i64: 1, 128>}, {transform_indices = @transform_3, window_bounds = array<i64: 256, 128>}]} {
    %c0_i32 = arith.constant 0 : i32
    %0 = arith.cmpi eq, %arg2, %c0_i32 : i32
    %1 = arith.extui %0 : i1 to i32
    %c0_i32_0 = arith.constant 0 : i32
    %2 = arith.cmpi ne, %1, %c0_i32_0 : i32
    scf.if %2 {
      %c0_10 = arith.constant 0 : index
      %c0_11 = arith.constant 0 : index
      %12 = vector.load %arg5[%c0_10, %c0_11] : memref<1x128xf32, #tpu.memory_space<vmem>>, vector<1x128xf32>
      %13 = vector.shape_cast %12 : vector<1x128xf32> to vector<1x128xf32>
      %14 = vector.broadcast %13 : vector<1x128xf32> to vector<256x128xf32>
      %c0_12 = arith.constant 0 : index
      %c0_13 = arith.constant 0 : index
      %15 = vector.load %arg7[%c0_12, %c0_13] : memref<256x128xf32, #tpu.memory_space<vmem>>, vector<256x128xf32>
      tpu.vector_store %arg7[%c0_12, %c0_13], %14 {strides = array<i32>} : memref<256x128xf32, #tpu.memory_space<vmem>>, vector<256x128xf32>,
    } else {
    }
    %c0 = arith.constant 0 : index
    %c0_1 = arith.constant 0 : index
    %3 = vector.load %arg7[%c0, %c0_1] : memref<256x128xf32, #tpu.memory_space<vmem>>, vector<256x128xf32>
    %c0_2 = arith.constant 0 : index
    %c0_3 = arith.constant 0 : index
    %4 = vector.load %arg3[%c0_2, %c0_3] : memref<256x128xbf16, #tpu.memory_space<vmem>>, vector<256x128xbf16>
    %c0_4 = arith.constant 0 : index
    %c0_5 = arith.constant 0 : index
    %5 = vector.load %arg4[%c0_4, %c0_5] : memref<128x128xbf16, #tpu.memory_space<vmem>>, vector<128x128xbf16>
    %cst = arith.constant dense<0.000000e+00> : vector<256x128xf32>
    %6 = tpu.matmul %4, %5, %cst {dimension_numbers = #tpu.dot_dimension_numbers<[1], [0], [0], [1], [0, 0, 1, 1], [], []>} : vector<256x128xbf16>, vector<128x128xbf16>, vector<256x128xf32> -> vector<256x128xf32>
    %7 = arith.addf %3, %6 : vector<256x128xf32>
    %c0_6 = arith.constant 0 : index
    %c0_7 = arith.constant 0 : index
    %8 = vector.load %arg7[%c0_6, %c0_7] : memref<256x128xf32, #tpu.memory_space<vmem>>, vector<256x128xf32>
    tpu.vector_store %arg7[%c0_6, %c0_7], %7 {strides = array<i32>} : memref<256x128xf32, #tpu.memory_space<vmem>>, vector<256x128xf32>,
    %c0_i32_8 = arith.constant 0 : i32
    %9 = arith.cmpi eq, %arg2, %c0_i32_8 : i32
    %10 = arith.extui %9 : i1 to i32
    %c0_i32_9 = arith.constant 0 : i32
    %11 = arith.cmpi ne, %10, %c0_i32_9 : i32
    scf.if %11 {
      %c0_10 = arith.constant 0 : index
      %c0_11 = arith.constant 0 : index
      %12 = vector.load %arg7[%c0_10, %c0_11] : memref<256x128xf32, #tpu.memory_space<vmem>>, vector<256x128xf32>
      %c0_12 = arith.constant 0 : index
      %c0_13 = arith.constant 0 : index
      %13 = vector.load %arg6[%c0_12, %c0_13] : memref<256x128xf32, #tpu.memory_space<vmem>>, vector<256x128xf32>
      tpu.vector_store %arg6[%c0_12, %c0_13], %12 {strides = array<i32>} : memref<256x128xf32, #tpu.memory_space<vmem>>, vector<256x128xf32>,
    } else {
    }
    return
  }
  func.func @transform_0(%arg0: i32, %arg1: i32, %arg2: i32) -> (i32, i32) {
    %c0_i32 = arith.constant 0 : i32
    return %arg0, %arg2 : i32, i32
  }
  func.func @transform_1(%arg0: i32, %arg1: i32, %arg2: i32) -> (i32, i32) {
    %c0_i32 = arith.constant 0 : i32
    return %arg2, %arg1 : i32, i32
  }
  func.func @transform_2(%arg0: i32, %arg1: i32, %arg2: i32) -> (i32, i32) {
    %c0_i32 = arith.constant 0 : i32
    %c0_i32_0 = arith.constant 0 : i32
    return %c0_i32, %arg1 : i32, i32
  }
  func.func @transform_3(%arg0: i32, %arg1: i32, %arg2: i32) -> (i32, i32) {
    %c0_i32 = arith.constant 0 : i32
    return %arg0, %arg1 : i32, i32
  }
}

</mosaic_0001>

<llo_original>
// kernel: tpu_custom_call.1
$region0: #{tpu_custom_call.1}
  #allocation0 [shape = 'u32[]', space=smem, size = 0x4, offset = 0x4, fixed_abs, tag = 'smem constant byte address 0x4 - core index']
  #allocation1 [shape = 'u32[72,128]{1,0:T(1,128)}', space=vmem, size = 0x9000, scoped, tag = 'internal scratch']
  #allocation2 [shape = 'f32[256,128]{1,0:T(8,128)}', space=vmem, size = 0x20000, scoped, tag = 'scratch operand']
  %s0 = inlined_call_operand.hbm [shape: bf16[512,128], index: 0, kind: input, shape index: {}]
  %s1 = inlined_call_operand.hbm [shape: bf16[128,128], index: 1, kind: input, shape index: {}]
  %s2 = inlined_call_operand.vmem [shape: f32[1,128], index: 2, kind: input, shape index: {}]
  %s3 = inlined_call_operand.hbm [shape: f32[512,128], index: 3, kind: output, shape index: {}]
  %s4 = sld [smem:[#allocation0]]
  $region61: #{tpu_custom_call.1} parent=0
    _
  %s6 = ssub.s32 1, %s4
  %s7 = scalar_select 0, %s6, %s4
  $region1: #{tpu_custom_call.1} parent=0
    #allocation3 [shape = 'u8[131072]{0}', space=vmem, size = 0x20000, scoped, tag = 'input window, operand 0']
    #allocation4 [shape = 's32[2]{0}', space=sflag, size = 0x8, scoped, tag = 'scoped memory for tpu_custom_call.1']
    #allocation5 [shape = 's32[2]{0}', space=sflag, size = 0x8, scoped, tag = 'scoped memory for tpu_custom_call.1']
    #allocation6 [shape = 'u8[32768]{0}', space=vmem, size = 0x8000, scoped, tag = 'input window, operand 1, single buffered']
    #allocation7 [shape = 's32[1]{0}', space=sflag, size = 0x4, scoped, tag = 'scoped memory for tpu_custom_call.1']
    #allocation8 [shape = 'u8[262144]{0}', space=vmem, size = 0x40000, scoped, tag = 'output window, operand 0']
    %8 = vsyncpa [#allocation4], 0
    %s9 = scalar_lea.sflag [#allocation4], 1
    %10 = vsyncpa %s9, 0
    %11 = vsyncpa [#allocation7], 0
    %12 = vsyncpa [#allocation5], 0
    %s13 = scalar_lea.sflag [#allocation5], 1
    %14 = vsyncpa %s13, 0
    loop: start=0, step=1, limit=4
    $region2: #{tpu_custom_call.1} parent=1 // loop_pre_header
      _
    $region3: #{tpu_custom_call.1} parent=1 // loop_header
      %s16 = sphi 0, %s20
      %p17 = scmp.ge.s32.totalorder %s16, 4
      %s23 = sphi 0, %s42
      %s24 = sphi 0, %s38
      %s25 = sphi 0, %s34
      %s26 = sphi 0, %s23
      %s27 = sphi 0, %s24
      %s28 = sphi 0, %s25
      %s29 = sphi 0, %s26
      %s30 = sphi 0, %s27
      %s31 = sphi 0, %s28
      %s47 = sphi 0, %s49
      %s50 = sphi 0, %s47
      %s51 = sphi 0, %s50
      %s67 = sphi 0, %s51
      %s75 = sphi 0, %s77
      %s78 = sphi 0, %s75
      %s79 = sphi 0, %s78
      %s95 = sphi 0, %s79
      %s101 = sphi 0, %s103
      %s104 = sphi 0, %s101
      %s105 = sphi 0, %s104
      %s121 = sphi 0, %s105
      %s129 = sphi 0, %s131
      %s132 = sphi 0, %s129
      %s133 = sphi 0, %s132
      %s149 = sphi 0, %s133
    $region4: #{tpu_custom_call.1} parent=1 // loop_header_branch
      %19 = sbr.rel (%p17) target = $region8
    $region5: #{tpu_custom_call.1} parent=1 // loop_body
      %s21 = ssub.s32 %s16, 1
      %s22 = ssub.s32 %s16, 2
      %s32 = sadd.s32 1, %s25
      %p33 = scmp.ge.s32.totalorder %s32, 1
      %s34 = scalar_select %p33, 0, %s32
      %s35 = sadd.s32 1, %s24
      %s36 = scalar_select %p33, %s35, %s24
      %p37 = scmp.ge.s32.totalorder %s36, 1
      %s38 = scalar_select %p37, 0, %s36
      %s39 = sadd.s32 1, %s23
      %s40 = scalar_select %p37, %s39, %s23
      %p41 = scmp.ge.s32.totalorder %s40, 2
      %s42 = scalar_select %p41, 0, %s40
      %s43 = ssub.s32 %s23, %s42
      %s44 = ssub.s32 %s25, %s34
      %s45 = sor.u32 %s43, %s44
      %p46 = scmp.eq.s32.totalorder %s45, 0
      %s48 = sadd.s32 %s47, 1
      %s49 = scalar_select %p46, %s47, %s48
      %p52 = pneg %p46
      %p53 = scmp.eq.s32.totalorder %s16, 1
      %p54 = por %p52, %p53
      %p55 = scmp.ne.s32.totalorder %s47, %s50
      %p56 = scmp.eq.s32.totalorder %s16, 0
      %p57 = por %p55, %p56
      %p58 = scmp.ne.s32.totalorder %s47, %s50
      %p59 = scmp.eq.s32.totalorder %s21, 1
      %p60 = por %p58, %p59
      %p61 = scmp.ne.s32.totalorder %s50, %s51
      %p62 = scmp.eq.s32.totalorder %s21, 0
      %p63 = por %p61, %p62
      %p64 = scmp.ne.s32.totalorder %s50, %s51
      %p65 = scmp.eq.s32.totalorder %s22, 1
      %p66 = por %p64, %p65
      %p68 = scmp.ne.s32.totalorder %s51, %s67
      %p69 = scmp.eq.s32.totalorder %s22, 0
      %p70 = por %p68, %p69
      %s71 = ssub.s32 %s25, %s34
      %s72 = ssub.s32 %s24, %s38
      %s73 = sor.u32 %s71, %s72
      %p74 = scmp.eq.s32.totalorder %s73, 0
      %s76 = sadd.s32 %s75, 1
      %s77 = scalar_select %p74, %s75, %s76
      %p80 = pneg %p74
      %p81 = scmp.eq.s32.totalorder %s16, 1
      %p82 = por %p80, %p81
      %p83 = scmp.ne.s32.totalorder %s75, %s78
      %p84 = scmp.eq.s32.totalorder %s16, 0
      %p85 = por %p83, %p84
      %p86 = scmp.ne.s32.totalorder %s75, %s78
      %p87 = scmp.eq.s32.totalorder %s21, 1
      %p88 = por %p86, %p87
      %p89 = scmp.ne.s32.totalorder %s78, %s79
      %p90 = scmp.eq.s32.totalorder %s21, 0
      %p91 = por %p89, %p90
      %p92 = scmp.ne.s32.totalorder %s78, %s79
      %p93 = scmp.eq.s32.totalorder %s22, 1
      %p94 = por %p92, %p93
      %p96 = scmp.ne.s32.totalorder %s79, %s95
      %p97 = scmp.eq.s32.totalorder %s22, 0
      %p98 = por %p96, %p97
      %s99 = ssub.s32 %s24, %s38
      %p100 = scmp.eq.s32.totalorder %s99, 0
      %s102 = sadd.s32 %s101, 1
      %s103 = scalar_select %p100, %s101, %s102
      %p106 = pneg %p100
      %p107 = scmp.eq.s32.totalorder %s16, 1
      %p108 = por %p106, %p107
      %p109 = scmp.ne.s32.totalorder %s101, %s104
      %p110 = scmp.eq.s32.totalorder %s16, 0
      %p111 = por %p109, %p110
      %p112 = scmp.ne.s32.totalorder %s101, %s104
      %p113 = scmp.eq.s32.totalorder %s21, 1
      %p114 = por %p112, %p113
      %p115 = scmp.ne.s32.totalorder %s104, %s105
      %p116 = scmp.eq.s32.totalorder %s21, 0
      %p117 = por %p115, %p116
      %p118 = scmp.ne.s32.totalorder %s104, %s105
      %p119 = scmp.eq.s32.totalorder %s22, 1
      %p120 = por %p118, %p119
      %p122 = scmp.ne.s32.totalorder %s105, %s121
      %p123 = scmp.eq.s32.totalorder %s22, 0
      %p124 = por %p122, %p123
      %s125 = ssub.s32 %s23, %s42
      %s126 = ssub.s32 %s24, %s38
      %s127 = sor.u32 %s125, %s126
      %p128 = scmp.eq.s32.totalorder %s127, 0
      %s130 = sadd.s32 %s129, 1
      %s131 = scalar_select %p128, %s129, %s130
      %p134 = pneg %p128
      %p135 = scmp.eq.s32.totalorder %s16, 1
      %p136 = por %p134, %p135
      %p137 = scmp.ne.s32.totalorder %s129, %s132
      %p138 = scmp.eq.s32.totalorder %s16, 0
      %p139 = por %p137, %p138
      %p140 = scmp.ne.s32.totalorder %s129, %s132
      %p141 = scmp.eq.s32.totalorder %s21, 1
      %p142 = por %p140, %p141
      %p143 = scmp.ne.s32.totalorder %s132, %s133
      %p144 = scmp.eq.s32.totalorder %s21, 0
      %p145 = por %p143, %p144
      %p146 = scmp.ne.s32.totalorder %s132, %s133
      %p147 = scmp.eq.s32.totalorder %s22, 1
      %p148 = por %p146, %p147
      %p150 = scmp.ne.s32.totalorder %s133, %s149
      %p151 = scmp.eq.s32.totalorder %s22, 0
      %p152 = por %p150, %p151
      %p153 = scmp.le.s32.totalorder 1, %s16
      %p154 = scmp.lt.s32.totalorder %s16, 3
      %p155 = pnand %p153, %p154
      %p156 = pneg %p155
      // Predicated region
      $region9: #{tpu_custom_call.1} parent=5 // pred_check
        _
      $region10: #{tpu_custom_call.1} parent=5 // pred_check_branch
        %158 = sbr.rel (%p155) target = $region12
      $region11: #{tpu_custom_call.1} parent=5 // pred_region
        %s159 = ssub.s32 %s16, 1
        // Predicated region
        $region13: #{tpu_custom_call.1} parent=11 // pred_check
          %p160 = pneg %p91
        $region14: #{tpu_custom_call.1} parent=11 // pred_check_branch
          %162 = sbr.rel (%p160) target = $region16
        $region15: #{tpu_custom_call.1} parent=11 // pred_region
          %s163 = smul.u32 16, %s28
          %165 = vsyncadd [#allocation7], 0
          %s166 = sadd.s32 %s27, %s163
          %s167 = smul.addr %s166, 4
          %s168 = scalar_lea.hbm %s1, %s167
          %s169 = sshll.u32 %s168, 4
          %s170 = int_to_ptr.hbm [resolvable:$true] %s169
          %s171 = sshll.u32 [#allocation6], 4
          %s172 = int_to_ptr.vmem [resolvable:$true] %s171
          %177 = dma.hbm_to_vmem [thread:$0]  %s170, 1024, %s172, [#allocation7], 64, 64, 4
        $region16: #{tpu_custom_call.1} parent=11 // pred_fallthru
          _
        // Predicated region
        $region17: #{tpu_custom_call.1} parent=11 // pred_check
          %p178 = pneg %p117
        $region18: #{tpu_custom_call.1} parent=11 // pred_check_branch
          %180 = sbr.rel (%p178) target = $region20
        $region19: #{tpu_custom_call.1} parent=11 // pred_region
          %p181 = scmp.lt.s32.totalorder %s27, 0
          %s182 = scalar_select %p181, %s27, 0
          %s183 = scalar_lea.vmem %s2, %s182
        $region20: #{tpu_custom_call.1} parent=11 // pred_fallthru
          _
      $region12: #{tpu_custom_call.1} parent=5 // pred_fallthru
        _
      %p184 = scmp.lt.s32.totalorder %s16, 2
      // Predicated region
      $region21: #{tpu_custom_call.1} parent=5 // pred_check
        %p185 = pneg %p184
      $region22: #{tpu_custom_call.1} parent=5 // pred_check_branch
        %187 = sbr.rel (%p185) target = $region24
      $region23: #{tpu_custom_call.1} parent=5 // pred_region
        // Predicated region
        $region25: #{tpu_custom_call.1} parent=23 // pred_check
          %p188 = pneg %p57
        $region26: #{tpu_custom_call.1} parent=23 // pred_check_branch
          %190 = sbr.rel (%p188) target = $region28
        $region27: #{tpu_custom_call.1} parent=23 // pred_region
          %s191 = sand.u32 %s47, 1
          %s192 = scalar_lea.sflag [#allocation4], %s191
          %s193 = sand.u32 %s47, 1
          %s194 = smul.addr %s193, 128
          %s195 = scalar_lea.vmem [#allocation3], %s194
          %s196 = smul.u32 32, %s23
          %198 = vsyncadd %s192, 0
          %s199 = sadd.s32 %s25, %s196
          %s200 = smul.addr %s199, 4
          %s201 = scalar_lea.hbm %s0, %s200
          %s202 = sshll.u32 %s201, 4
          %s203 = int_to_ptr.hbm [resolvable:$true] %s202
          %s204 = sshll.u32 %s195, 4
          %s205 = int_to_ptr.vmem [resolvable:$true] %s204
          %210 = dma.hbm_to_vmem [thread:$0]  %s203, 2048, %s205, %s192, 64, 64, 4
        $region28: #{tpu_custom_call.1} parent=23 // pred_fallthru
          _
      $region24: #{tpu_custom_call.1} parent=5 // pred_fallthru
        _
      %p211 = scmp.le.s32.totalorder 1, %s16
      %p212 = scmp.lt.s32.totalorder %s16, 3
      %p213 = pnand %p211, %p212
      %p214 = pneg %p213
      // Predicated region
      $region29: #{tpu_custom_call.1} parent=5 // pred_check
        _
      $region30: #{tpu_custom_call.1} parent=5 // pred_check_branch
        %216 = sbr.rel (%p213) target = $region32
      $region31: #{tpu_custom_call.1} parent=5 // pred_region
        %s217 = ssub.s32 %s16, 1
        %s218 = sand.u32 %s50, 1
        %s219 = scalar_lea.sflag [#allocation4], %s218
        %s220 = sand.u32 %s50, 1
        %s221 = smul.addr %s220, 128
        %s222 = scalar_lea.vmem [#allocation3], %s221
        // Predicated region
        $region33: #{tpu_custom_call.1} parent=31 // pred_check
          %p223 = pneg %p63
        $region34: #{tpu_custom_call.1} parent=31 // pred_check_branch
          %225 = sbr.rel (%p223) target = $region36
        $region35: #{tpu_custom_call.1} parent=31 // pred_region
          %227 = dma.done %s219, 2048
        $region36: #{tpu_custom_call.1} parent=31 // pred_fallthru
          _
        // Predicated region
        $region37: #{tpu_custom_call.1} parent=31 // pred_check
          %p228 = pneg %p91
        $region38: #{tpu_custom_call.1} parent=31 // pred_check_branch
          %230 = sbr.rel (%p228) target = $region40
        $region39: #{tpu_custom_call.1} parent=31 // pred_region
          %232 = dma.done [#allocation7], 1024
        $region40: #{tpu_custom_call.1} parent=31 // pred_fallthru
          _
        %s233 = sand.u32 %s50, 1
        %s234 = scalar_lea.sflag [#allocation4], %s233
        %s235 = sand.u32 %s50, 1
        %s236 = smul.addr %s235, 128
        %s237 = scalar_lea.vmem [#allocation3], %s236
        %p238 = pneg %p63
        %p239 = pneg %p60
        %p240 = pneg %p91
        %p241 = pneg %p88
        %p242 = scmp.lt.s32.totalorder %s27, 0
        %s243 = scalar_select %p242, %s27, 0
        %s244 = scalar_lea.vmem %s2, %s243
        %p245 = pneg %p117
        %p246 = pneg %p114
        %p247 = pneg %p145
        %p248 = pneg %p142
        %s249 = sand.u32 %s132, 1
        %s250 = scalar_lea.sflag [#allocation5], %s249
        %s251 = sand.u32 %s132, 1
        %s252 = smul.addr %s251, 256
        %s253 = scalar_lea.vmem [#allocation8], %s252
        %s254 = smul.u32 32, %s26
        %s255 = smul.u32 16, %s28
        %p256 = scmp.lt.s32.totalorder %s27, 0
        %s257 = scalar_select %p256, %s27, 0
        %s258 = scalar_lea.vmem %s2, %s257
        %s259 = smul.u32 32, %s26
        %p260 = scmp.eq.s32.totalorder %s28, 0
        // Predicated region
        $region41: #{tpu_custom_call.1} parent=31 // pred_check
          %p261 = pneg %p260
        $region42: #{tpu_custom_call.1} parent=31 // pred_check_branch
          %263 = sbr.rel (%p261) target = $region44
        $region43: #{tpu_custom_call.1} parent=31 // pred_region
          %v264 = vld [vmem:[%s258] sm:$0x1]
          %v266 = vperm.slane %v264, 0
          %268 = vst [vmem:[#allocation2] sm:$0xff] %v266
          %269 = vst [vmem:[#allocation2 + $0x8] sm:$0xff] %v266
          %270 = vst [vmem:[#allocation2 + $0x10] sm:$0xff] %v266
          %271 = vst [vmem:[#allocation2 + $0x18] sm:$0xff] %v266
          %272 = vst [vmem:[#allocation2 + $0x20] sm:$0xff] %v266
          %273 = vst [vmem:[#allocation2 + $0x28] sm:$0xff] %v266
          %274 = vst [vmem:[#allocation2 + $0x30] sm:$0xff] %v266
          %275 = vst [vmem:[#allocation2 + $0x38] sm:$0xff] %v266
          %276 = vst [vmem:[#allocation2 + $0x40] sm:$0xff] %v266
          %277 = vst [vmem:[#allocation2 + $0x48] sm:$0xff] %v266
          %278 = vst [vmem:[#allocation2 + $0x50] sm:$0xff] %v266
          %279 = vst [vmem:[#allocation2 + $0x58] sm:$0xff] %v266
          %280 = vst [vmem:[#allocation2 + $0x60] sm:$0xff] %v266
          %281 = vst [vmem:[#allocation2 + $0x68] sm:$0xff] %v266
          %282 = vst [vmem:[#allocation2 + $0x70] sm:$0xff] %v266
          %283 = vst [vmem:[#allocation2 + $0x78] sm:$0xff] %v266
          %284 = vst [vmem:[#allocation2 + $0x80] sm:$0xff] %v266
          %285 = vst [vmem:[#allocation2 + $0x88] sm:$0xff] %v266
          %286 = vst [vmem:[#allocation2 + $0x90] sm:$0xff] %v266
          %287 = vst [vmem:[#allocation2 + $0x98] sm:$0xff] %v266
          %288 = vst [vmem:[#allocation2 + $0xa0] sm:$0xff] %v266
          %289 = vst [vmem:[#allocation2 + $0xa8] sm:$0xff] %v266
          %290 = vst [vmem:[#allocation2 + $0xb0] sm:$0xff] %v266
          %291 = vst [vmem:[#allocation2 + $0xb8] sm:$0xff] %v266
          %292 = vst [vmem:[#allocation2 + $0xc0] sm:$0xff] %v266
          %293 = vst [vmem:[#allocation2 + $0xc8] sm:$0xff] %v266
          %294 = vst [vmem:[#allocation2 + $0xd0] sm:$0xff] %v266
          %295 = vst [vmem:[#allocation2 + $0xd8] sm:$0xff] %v266
          %296 = vst [vmem:[#allocation2 + $0xe0] sm:$0xff] %v266
          %297 = vst [vmem:[#allocation2 + $0xe8] sm:$0xff] %v266
          %298 = vst [vmem:[#allocation2 + $0xf0] sm:$0xff] %v266
          %299 = vst [vmem:[#allocation2 + $0xf8] sm:$0xff] %v266
        $region44: #{tpu_custom_call.1} parent=31 // pred_fallthru
          _
        %v300 = vld [vmem:[#allocation2] sm:$0xff]
        %v301 = vld [vmem:[#allocation2 + $0x8] sm:$0xff]
        %v302 = vld [vmem:[#allocation2 + $0x10] sm:$0xff]
        %v303 = vld [vmem:[#allocation2 + $0x18] sm:$0xff]
        %v304 = vld [vmem:[#allocation2 + $0x20] sm:$0xff]
        %v305 = vld [vmem:[#allocation2 + $0x28] sm:$0xff]
        %v306 = vld [vmem:[#allocation2 + $0x30] sm:$0xff]
        %v307 = vld [vmem:[#allocation2 + $0x38] sm:$0xff]
        %v308 = vld [vmem:[#allocation2 + $0x40] sm:$0xff]
        %v309 = vld [vmem:[#allocation2 + $0x48] sm:$0xff]
        %v310 = vld [vmem:[#allocation2 + $0x50] sm:$0xff]
        %v311 = vld [vmem:[#allocation2 + $0x58] sm:$0xff]
        %v312 = vld [vmem:[#allocation2 + $0x60] sm:$0xff]
        %v313 = vld [vmem:[#allocation2 + $0x68] sm:$0xff]
        %v314 = vld [vmem:[#allocation2 + $0x70] sm:$0xff]
        %v315 = vld [vmem:[#allocation2 + $0x78] sm:$0xff]
        %v316 = vld [vmem:[#allocation2 + $0x80] sm:$0xff]
        %v317 = vld [vmem:[#allocation2 + $0x88] sm:$0xff]
        %v318 = vld [vmem:[#allocation2 + $0x90] sm:$0xff]
        %v319 = vld [vmem:[#allocation2 + $0x98] sm:$0xff]
        %v320 = vld [vmem:[#allocation2 + $0xa0] sm:$0xff]
        %v321 = vld [vmem:[#allocation2 + $0xa8] sm:$0xff]
        %v322 = vld [vmem:[#allocation2 + $0xb0] sm:$0xff]
        %v323 = vld [vmem:[#allocation2 + $0xb8] sm:$0xff]
        %v324 = vld [vmem:[#allocation2 + $0xc0] sm:$0xff]
        %v325 = vld [vmem:[#allocation2 + $0xc8] sm:$0xff]
        %v326 = vld [vmem:[#allocation2 + $0xd0] sm:$0xff]
        %v327 = vld [vmem:[#allocation2 + $0xd8] sm:$0xff]
        %v328 = vld [vmem:[#allocation2 + $0xe0] sm:$0xff]
        %v329 = vld [vmem:[#allocation2 + $0xe8] sm:$0xff]
        %v330 = vld [vmem:[#allocation2 + $0xf0] sm:$0xff]
        %v331 = vld [vmem:[#allocation2 + $0xf8] sm:$0xff]
        %v332 = vld [vmem:[%s222] sm:$0xf]
        %v333 = vld [vmem:[%s222 + $0x4] sm:$0xf]
        %v334 = vld [vmem:[%s222 + $0x8] sm:$0xf]
        %v335 = vld [vmem:[%s222 + $0xc] sm:$0xf]
        %v336 = vld [vmem:[%s222 + $0x10] sm:$0xf]
        %v337 = vld [vmem:[%s222 + $0x14] sm:$0xf]
        %v338 = vld [vmem:[%s222 + $0x18] sm:$0xf]
        %v339 = vld [vmem:[%s222 + $0x1c] sm:$0xf]
        %v340 = vld [vmem:[%s222 + $0x20] sm:$0xf]
        %v341 = vld [vmem:[%s222 + $0x24] sm:$0xf]
        %v342 = vld [vmem:[%s222 + $0x28] sm:$0xf]
        %v343 = vld [vmem:[%s222 + $0x2c] sm:$0xf]
        %v344 = vld [vmem:[%s222 + $0x30] sm:$0xf]
        %v345 = vld [vmem:[%s222 + $0x34] sm:$0xf]
        %v346 = vld [vmem:[%s222 + $0x38] sm:$0xf]
        %v347 = vld [vmem:[%s222 + $0x3c] sm:$0xf]
        %v348 = vld [vmem:[%s222 + $0x40] sm:$0xf]
        %v349 = vld [vmem:[%s222 + $0x44] sm:$0xf]
        %v350 = vld [vmem:[%s222 + $0x48] sm:$0xf]
        %v351 = vld [vmem:[%s222 + $0x4c] sm:$0xf]
        %v352 = vld [vmem:[%s222 + $0x50] sm:$0xf]
        %v353 = vld [vmem:[%s222 + $0x54] sm:$0xf]
        %v354 = vld [vmem:[%s222 + $0x58] sm:$0xf]
        %v355 = vld [vmem:[%s222 + $0x5c] sm:$0xf]
        %v356 = vld [vmem:[%s222 + $0x60] sm:$0xf]
        %v357 = vld [vmem:[%s222 + $0x64] sm:$0xf]
        %v358 = vld [vmem:[%s222 + $0x68] sm:$0xf]
        %v359 = vld [vmem:[%s222 + $0x6c] sm:$0xf]
        %v360 = vld [vmem:[%s222 + $0x70] sm:$0xf]
        %v361 = vld [vmem:[%s222 + $0x74] sm:$0xf]
        %v362 = vld [vmem:[%s222 + $0x78] sm:$0xf]
        %v363 = vld [vmem:[%s222 + $0x7c] sm:$0xf]
        %v364 = vld [vmem:[#allocation6] sm:$0xf]
        %v365 = vld [vmem:[#allocation6 + $0x4] sm:$0xf]
        %v366 = vld [vmem:[#allocation6 + $0x8] sm:$0xf]
        %v367 = vld [vmem:[#allocation6 + $0xc] sm:$0xf]
        %v368 = vld [vmem:[#allocation6 + $0x10] sm:$0xf]
        %v369 = vld [vmem:[#allocation6 + $0x14] sm:$0xf]
        %v370 = vld [vmem:[#allocation6 + $0x18] sm:$0xf]
        %v371 = vld [vmem:[#allocation6 + $0x1c] sm:$0xf]
        %v372 = vld [vmem:[#allocation6 + $0x20] sm:$0xf]
        %v373 = vld [vmem:[#allocation6 + $0x24] sm:$0xf]
        %v374 = vld [vmem:[#allocation6 + $0x28] sm:$0xf]
        %v375 = vld [vmem:[#allocation6 + $0x2c] sm:$0xf]
        %v376 = vld [vmem:[#allocation6 + $0x30] sm:$0xf]
        %v377 = vld [vmem:[#allocation6 + $0x34] sm:$0xf]
        %v378 = vld [vmem:[#allocation6 + $0x38] sm:$0xf]
        %v379 = vld [vmem:[#allocation6 + $0x3c] sm:$0xf]
        %v412 = vunpack.c.l.b16 %v332
        %v413 = vunpack.c.l.b16 %v333
        %v414 = vunpack.c.l.b16 %v334
        %v415 = vunpack.c.l.b16 %v335
        %v416 = vunpack.c.l.b16 %v336
        %v417 = vunpack.c.l.b16 %v337
        %v418 = vunpack.c.l.b16 %v338
        %v419 = vunpack.c.l.b16 %v339
        %v420 = vunpack.c.l.b16 %v340
        %v421 = vunpack.c.l.b16 %v341
        %v422 = vunpack.c.l.b16 %v342
        %v423 = vunpack.c.l.b16 %v343
        %v424 = vunpack.c.l.b16 %v344
        %v425 = vunpack.c.l.b16 %v345
        %v426 = vunpack.c.l.b16 %v346
        %v427 = vunpack.c.l.b16 %v347
        %v428 = vunpack.c.l.b16 %v348
        %v429 = vunpack.c.l.b16 %v349
        %v430 = vunpack.c.l.b16 %v350
        %v431 = vunpack.c.l.b16 %v351
        %v432 = vunpack.c.l.b16 %v352
        %v433 = vunpack.c.l.b16 %v353
        %v434 = vunpack.c.l.b16 %v354
        %v435 = vunpack.c.l.b16 %v355
        %v436 = vunpack.c.l.b16 %v356
        %v437 = vunpack.c.l.b16 %v357
        %v438 = vunpack.c.l.b16 %v358
        %v439 = vunpack.c.l.b16 %v359
        %v440 = vunpack.c.l.b16 %v360
        %v441 = vunpack.c.l.b16 %v361
        %v442 = vunpack.c.l.b16 %v362
        %v443 = vunpack.c.l.b16 %v363
        %v444 = vpack.c.b16 %v413, %v412
        %v445 = vpack.c.b16 %v415, %v414
        %v446 = vpack.c.b16 %v417, %v416
        %v447 = vpack.c.b16 %v419, %v418
        %v448 = vpack.c.b16 %v421, %v420
        %v449 = vpack.c.b16 %v423, %v422
        %v450 = vpack.c.b16 %v425, %v424
        %v451 = vpack.c.b16 %v427, %v426
        %v452 = vpack.c.b16 %v429, %v428
        %v453 = vpack.c.b16 %v431, %v430
        %v454 = vpack.c.b16 %v433, %v432
        %v455 = vpack.c.b16 %v435, %v434
        %v456 = vpack.c.b16 %v437, %v436
        %v457 = vpack.c.b16 %v439, %v438
        %v458 = vpack.c.b16 %v441, %v440
        %v459 = vpack.c.b16 %v443, %v442
        %v492 = vunpack.c.l.b16 %v364
        %v493 = vunpack.c.l.b16 %v365
        %v494 = vunpack.c.l.b16 %v366
        %v495 = vunpack.c.l.b16 %v367
        %v496 = vunpack.c.l.b16 %v368
        %v497 = vunpack.c.l.b16 %v369
        %v498 = vunpack.c.l.b16 %v370
        %v499 = vunpack.c.l.b16 %v371
        %v500 = vunpack.c.l.b16 %v372
        %v501 = vunpack.c.l.b16 %v373
        %v502 = vunpack.c.l.b16 %v374
        %v503 = vunpack.c.l.b16 %v375
        %v504 = vunpack.c.l.b16 %v376
        %v505 = vunpack.c.l.b16 %v377
        %v506 = vunpack.c.l.b16 %v378
        %v507 = vunpack.c.l.b16 %v379
        %v508 = vpack.c.b16 %v493, %v492
        %v509 = vpack.c.b16 %v495, %v494
        %v510 = vpack.c.b16 %v497, %v496
        %v511 = vpack.c.b16 %v499, %v498
        %v512 = vpack.c.b16 %v501, %v500
        %v513 = vpack.c.b16 %v503, %v502
        %v514 = vpack.c.b16 %v505, %v504
        %v515 = vpack.c.b16 %v507, %v506
        %524 = vmatpush.bf16.msra.mxu0 %v515
        %525 = vmatpush.bf16.msra.mxu0 %v514
        %526 = vmatpush.bf16.msra.mxu0 %v513
        %527 = vmatpush.bf16.msra.mxu0 %v512
        %528 = vmatpush.bf16.msra.mxu0 %v511
        %529 = vmatpush.bf16.msra.mxu0 %v510
        %530 = vmatpush.bf16.msra.mxu0 %v509
        %531 = vmatpush.bf16.msra.mxu0 %v508
        %532 = vmatmul.bf16.gmra.mxu0 %v444
        %v533 = vpop.f32.mrf.mxu0
        %v534 = vadd.f32 0.0, %v533
        %v535 = vpop.f32.mrf.mxu0
        %v536 = vadd.f32 0.0, %v535
        %537 = vmatmul.bf16.gmra.mxu0 %v445
        %v538 = vpop.f32.mrf.mxu0
        %v539 = vadd.f32 0.0, %v538
        %v540 = vpop.f32.mrf.mxu0
        %v541 = vadd.f32 0.0, %v540
        %542 = vmatmul.bf16.gmra.mxu0 %v446
        %v543 = vpop.f32.mrf.mxu0
        %v544 = vadd.f32 0.0, %v543
        %v545 = vpop.f32.mrf.mxu0
        %v546 = vadd.f32 0.0, %v545
        %547 = vmatmul.bf16.gmra.mxu0 %v447
        %v548 = vpop.f32.mrf.mxu0
        %v549 = vadd.f32 0.0, %v548
        %v550 = vpop.f32.mrf.mxu0
        %v551 = vadd.f32 0.0, %v550
        %552 = vmatmul.bf16.gmra.mxu0 %v448
        %v553 = vpop.f32.mrf.mxu0
        %v554 = vadd.f32 0.0, %v553
        %v555 = vpop.f32.mrf.mxu0
        %v556 = vadd.f32 0.0, %v555
        %557 = vmatmul.bf16.gmra.mxu0 %v449
        %v558 = vpop.f32.mrf.mxu0
        %v559 = vadd.f32 0.0, %v558
        %v560 = vpop.f32.mrf.mxu0
        %v561 = vadd.f32 0.0, %v560
        %562 = vmatmul.bf16.gmra.mxu0 %v450
        %v563 = vpop.f32.mrf.mxu0
        %v564 = vadd.f32 0.0, %v563
        %v565 = vpop.f32.mrf.mxu0
        %v566 = vadd.f32 0.0, %v565
        %567 = vmatmul.bf16.gmra.mxu0 %v451
        %v568 = vpop.f32.mrf.mxu0
        %v569 = vadd.f32 0.0, %v568
        %v570 = vpop.f32.mrf.mxu0
        %v571 = vadd.f32 0.0, %v570
        %572 = vmatmul.bf16.gmra.mxu0 %v452
        %v573 = vpop.f32.mrf.mxu0
        %v574 = vadd.f32 0.0, %v573
        %v575 = vpop.f32.mrf.mxu0
        %v576 = vadd.f32 0.0, %v575
        %577 = vmatmul.bf16.gmra.mxu0 %v453
        %v578 = vpop.f32.mrf.mxu0
        %v579 = vadd.f32 0.0, %v578
        %v580 = vpop.f32.mrf.mxu0
        %v581 = vadd.f32 0.0, %v580
        %582 = vmatmul.bf16.gmra.mxu0 %v454
        %v583 = vpop.f32.mrf.mxu0
        %v584 = vadd.f32 0.0, %v583
        %v585 = vpop.f32.mrf.mxu0
        %v586 = vadd.f32 0.0, %v585
        %587 = vmatmul.bf16.gmra.mxu0 %v455
        %v588 = vpop.f32.mrf.mxu0
        %v589 = vadd.f32 0.0, %v588
        %v590 = vpop.f32.mrf.mxu0
        %v591 = vadd.f32 0.0, %v590
        %592 = vmatmul.bf16.gmra.mxu0 %v456
        %v593 = vpop.f32.mrf.mxu0
        %v594 = vadd.f32 0.0, %v593
        %v595 = vpop.f32.mrf.mxu0
        %v596 = vadd.f32 0.0, %v595
        %597 = vmatmul.bf16.gmra.mxu0 %v457
        %v598 = vpop.f32.mrf.mxu0
        %v599 = vadd.f32 0.0, %v598
        %v600 = vpop.f32.mrf.mxu0
        %v601 = vadd.f32 0.0, %v600
        %602 = vmatmul.bf16.gmra.mxu0 %v458
        %v603 = vpop.f32.mrf.mxu0
        %v604 = vadd.f32 0.0, %v603
        %v605 = vpop.f32.mrf.mxu0
        %v606 = vadd.f32 0.0, %v605
        %607 = vmatmul.bf16.gmra.mxu0 %v459
        %v608 = vpop.f32.mrf.mxu0
        %v609 = vadd.f32 0.0, %v608
        %v610 = vpop.f32.mrf.mxu0
        %v611 = vadd.f32 0.0, %v610
        %612 = vdwg.mxu0
        %v613 = vadd.f32 %v300, %v534
        %v614 = vadd.f32 %v301, %v536
        %v615 = vadd.f32 %v302, %v539
        %v616 = vadd.f32 %v303, %v541
        %v617 = vadd.f32 %v304, %v544
        %v618 = vadd.f32 %v305, %v546
        %v619 = vadd.f32 %v306, %v549
        %v620 = vadd.f32 %v307, %v551
        %v621 = vadd.f32 %v308, %v554
        %v622 = vadd.f32 %v309, %v556
        %v623 = vadd.f32 %v310, %v559
        %v624 = vadd.f32 %v311, %v561
        %v625 = vadd.f32 %v312, %v564
        %v626 = vadd.f32 %v313, %v566
        %v627 = vadd.f32 %v314, %v569
        %v628 = vadd.f32 %v315, %v571
        %v629 = vadd.f32 %v316, %v574
        %v630 = vadd.f32 %v317, %v576
        %v631 = vadd.f32 %v318, %v579
        %v632 = vadd.f32 %v319, %v581
        %v633 = vadd.f32 %v320, %v584
        %v634 = vadd.f32 %v321, %v586
        %v635 = vadd.f32 %v322, %v589
        %v636 = vadd.f32 %v323, %v591
        %v637 = vadd.f32 %v324, %v594
        %v638 = vadd.f32 %v325, %v596
        %v639 = vadd.f32 %v326, %v599
        %v640 = vadd.f32 %v327, %v601
        %v641 = vadd.f32 %v328, %v604
        %v642 = vadd.f32 %v329, %v606
        %v643 = vadd.f32 %v330, %v609
        %v644 = vadd.f32 %v331, %v611
        %645 = vst [vmem:[#allocation2] sm:$0xff] %v613
        %646 = vst [vmem:[#allocation2 + $0x8] sm:$0xff] %v614
        %647 = vst [vmem:[#allocation2 + $0x10] sm:$0xff] %v615
        %648 = vst [vmem:[#allocation2 + $0x18] sm:$0xff] %v616
        %649 = vst [vmem:[#allocation2 + $0x20] sm:$0xff] %v617
        %650 = vst [vmem:[#allocation2 + $0x28] sm:$0xff] %v618
        %651 = vst [vmem:[#allocation2 + $0x30] sm:$0xff] %v619
        %652 = vst [vmem:[#allocation2 + $0x38] sm:$0xff] %v620
        %653 = vst [vmem:[#allocation2 + $0x40] sm:$0xff] %v621
        %654 = vst [vmem:[#allocation2 + $0x48] sm:$0xff] %v622
        %655 = vst [vmem:[#allocation2 + $0x50] sm:$0xff] %v623
        %656 = vst [vmem:[#allocation2 + $0x58] sm:$0xff] %v624
        %657 = vst [vmem:[#allocation2 + $0x60] sm:$0xff] %v625
        %658 = vst [vmem:[#allocation2 + $0x68] sm:$0xff] %v626
        %659 = vst [vmem:[#allocation2 + $0x70] sm:$0xff] %v627
        %660 = vst [vmem:[#allocation2 + $0x78] sm:$0xff] %v628
        %661 = vst [vmem:[#allocation2 + $0x80] sm:$0xff] %v629
        %662 = vst [vmem:[#allocation2 + $0x88] sm:$0xff] %v630
        %663 = vst [vmem:[#allocation2 + $0x90] sm:$0xff] %v631
        %664 = vst [vmem:[#allocation2 + $0x98] sm:$0xff] %v632
        %665 = vst [vmem:[#allocation2 + $0xa0] sm:$0xff] %v633
        %666 = vst [vmem:[#allocation2 + $0xa8] sm:$0xff] %v634
        %667 = vst [vmem:[#allocation2 + $0xb0] sm:$0xff] %v635
        %668 = vst [vmem:[#allocation2 + $0xb8] sm:$0xff] %v636
        %669 = vst [vmem:[#allocation2 + $0xc0] sm:$0xff] %v637
        %670 = vst [vmem:[#allocation2 + $0xc8] sm:$0xff] %v638
        %671 = vst [vmem:[#allocation2 + $0xd0] sm:$0xff] %v639
        %672 = vst [vmem:[#allocation2 + $0xd8] sm:$0xff] %v640
        %673 = vst [vmem:[#allocation2 + $0xe0] sm:$0xff] %v641
        %674 = vst [vmem:[#allocation2 + $0xe8] sm:$0xff] %v642
        %675 = vst [vmem:[#allocation2 + $0xf0] sm:$0xff] %v643
        %676 = vst [vmem:[#allocation2 + $0xf8] sm:$0xff] %v644
        // Predicated region
        $region45: #{tpu_custom_call.1} parent=31 // pred_check
          %p677 = pneg %p260
        $region46: #{tpu_custom_call.1} parent=31 // pred_check_branch
          %679 = sbr.rel (%p677) target = $region48
        $region47: #{tpu_custom_call.1} parent=31 // pred_region
          %v680 = vld [vmem:[#allocation2] sm:$0xff]
          %v681 = vld [vmem:[#allocation2 + $0x8] sm:$0xff]
          %v682 = vld [vmem:[#allocation2 + $0x10] sm:$0xff]
          %v683 = vld [vmem:[#allocation2 + $0x18] sm:$0xff]
          %v684 = vld [vmem:[#allocation2 + $0x20] sm:$0xff]
          %v685 = vld [vmem:[#allocation2 + $0x28] sm:$0xff]
          %v686 = vld [vmem:[#allocation2 + $0x30] sm:$0xff]
          %v687 = vld [vmem:[#allocation2 + $0x38] sm:$0xff]
          %v688 = vld [vmem:[#allocation2 + $0x40] sm:$0xff]
          %v689 = vld [vmem:[#allocation2 + $0x48] sm:$0xff]
          %v690 = vld [vmem:[#allocation2 + $0x50] sm:$0xff]
          %v691 = vld [vmem:[#allocation2 + $0x58] sm:$0xff]
          %v692 = vld [vmem:[#allocation2 + $0x60] sm:$0xff]
          %v693 = vld [vmem:[#allocation2 + $0x68] sm:$0xff]
          %v694 = vld [vmem:[#allocation2 + $0x70] sm:$0xff]
          %v695 = vld [vmem:[#allocation2 + $0x78] sm:$0xff]
          %v696 = vld [vmem:[#allocation2 + $0x80] sm:$0xff]
          %v697 = vld [vmem:[#allocation2 + $0x88] sm:$0xff]
          %v698 = vld [vmem:[#allocation2 + $0x90] sm:$0xff]
          %v699 = vld [vmem:[#allocation2 + $0x98] sm:$0xff]
          %v700 = vld [vmem:[#allocation2 + $0xa0] sm:$0xff]
          %v701 = vld [vmem:[#allocation2 + $0xa8] sm:$0xff]
          %v702 = vld [vmem:[#allocation2 + $0xb0] sm:$0xff]
          %v703 = vld [vmem:[#allocation2 + $0xb8] sm:$0xff]
          %v704 = vld [vmem:[#allocation2 + $0xc0] sm:$0xff]
          %v705 = vld [vmem:[#allocation2 + $0xc8] sm:$0xff]
          %v706 = vld [vmem:[#allocation2 + $0xd0] sm:$0xff]
          %v707 = vld [vmem:[#allocation2 + $0xd8] sm:$0xff]
          %v708 = vld [vmem:[#allocation2 + $0xe0] sm:$0xff]
          %v709 = vld [vmem:[#allocation2 + $0xe8] sm:$0xff]
          %v710 = vld [vmem:[#allocation2 + $0xf0] sm:$0xff]
          %v711 = vld [vmem:[#allocation2 + $0xf8] sm:$0xff]
          %712 = vst [vmem:[%s253] sm:$0xff] %v680
          %713 = vst [vmem:[%s253 + $0x8] sm:$0xff] %v681
          %714 = vst [vmem:[%s253 + $0x10] sm:$0xff] %v682
          %715 = vst [vmem:[%s253 + $0x18] sm:$0xff] %v683
          %716 = vst [vmem:[%s253 + $0x20] sm:$0xff] %v684
          %717 = vst [vmem:[%s253 + $0x28] sm:$0xff] %v685
          %718 = vst [vmem:[%s253 + $0x30] sm:$0xff] %v686
          %719 = vst [vmem:[%s253 + $0x38] sm:$0xff] %v687
          %720 = vst [vmem:[%s253 + $0x40] sm:$0xff] %v688
          %721 = vst [vmem:[%s253 + $0x48] sm:$0xff] %v689
          %722 = vst [vmem:[%s253 + $0x50] sm:$0xff] %v690
          %723 = vst [vmem:[%s253 + $0x58] sm:$0xff] %v691
          %724 = vst [vmem:[%s253 + $0x60] sm:$0xff] %v692
          %725 = vst [vmem:[%s253 + $0x68] sm:$0xff] %v693
          %726 = vst [vmem:[%s253 + $0x70] sm:$0xff] %v694
          %727 = vst [vmem:[%s253 + $0x78] sm:$0xff] %v695
          %728 = vst [vmem:[%s253 + $0x80] sm:$0xff] %v696
          %729 = vst [vmem:[%s253 + $0x88] sm:$0xff] %v697
          %730 = vst [vmem:[%s253 + $0x90] sm:$0xff] %v698
          %731 = vst [vmem:[%s253 + $0x98] sm:$0xff] %v699
          %732 = vst [vmem:[%s253 + $0xa0] sm:$0xff] %v700
          %733 = vst [vmem:[%s253 + $0xa8] sm:$0xff] %v701
          %734 = vst [vmem:[%s253 + $0xb0] sm:$0xff] %v702
          %735 = vst [vmem:[%s253 + $0xb8] sm:$0xff] %v703
          %736 = vst [vmem:[%s253 + $0xc0] sm:$0xff] %v704
          %737 = vst [vmem:[%s253 + $0xc8] sm:$0xff] %v705
          %738 = vst [vmem:[%s253 + $0xd0] sm:$0xff] %v706
          %739 = vst [vmem:[%s253 + $0xd8] sm:$0xff] %v707
          %740 = vst [vmem:[%s253 + $0xe0] sm:$0xff] %v708
          %741 = vst [vmem:[%s253 + $0xe8] sm:$0xff] %v709
          %742 = vst [vmem:[%s253 + $0xf0] sm:$0xff] %v710
          %743 = vst [vmem:[%s253 + $0xf8] sm:$0xff] %v711
        $region48: #{tpu_custom_call.1} parent=31 // pred_fallthru
          _
        %s744 = sand.u32 %s132, 1
        %s745 = scalar_lea.sflag [#allocation5], %s744
        %s746 = sand.u32 %s132, 1
        %s747 = smul.addr %s746, 256
        %s748 = scalar_lea.vmem [#allocation8], %s747
        // Predicated region
        $region49: #{tpu_custom_call.1} parent=31 // pred_check
          %p749 = pneg %p142
        $region50: #{tpu_custom_call.1} parent=31 // pred_check_branch
          %751 = sbr.rel (%p749) target = $region52
        $region51: #{tpu_custom_call.1} parent=31 // pred_region
          %s752 = smul.u32 32, %s26
          %754 = vsyncadd %s745, 0
          %s755 = sadd.s32 %s27, %s752
          %s756 = smul.addr %s755, 8
          %s757 = scalar_lea.hbm %s3, %s756
          %s758 = sshll.u32 %s748, 4
          %s759 = int_to_ptr.vmem [resolvable:$true] %s758
          %s760 = sshll.u32 %s757, 4
          %s761 = int_to_ptr.hbm [resolvable:$true] %s760
          %766 = dma.vmem_to_hbm [thread:$0]  %s759, 4096, %s761, %s745, 128, 128, 8
        $region52: #{tpu_custom_call.1} parent=31 // pred_fallthru
          _
      $region32: #{tpu_custom_call.1} parent=5 // pred_fallthru
        _
      %p767 = scmp.le.s32.totalorder 2, %s16
      // Predicated region
      $region53: #{tpu_custom_call.1} parent=5 // pred_check
        %p768 = pneg %p767
      $region54: #{tpu_custom_call.1} parent=5 // pred_check_branch
        %770 = sbr.rel (%p768) target = $region56
      $region55: #{tpu_custom_call.1} parent=5 // pred_region
        %s771 = ssub.s32 %s16, 2
        // Predicated region
        $region57: #{tpu_custom_call.1} parent=55 // pred_check
          %p772 = pneg %p148
        $region58: #{tpu_custom_call.1} parent=55 // pred_check_branch
          %774 = sbr.rel (%p772) target = $region60
        $region59: #{tpu_custom_call.1} parent=55 // pred_region
          %s775 = sand.u32 %s133, 1
          %s776 = scalar_lea.sflag [#allocation5], %s775
          %s777 = sand.u32 %s133, 1
          %s778 = smul.addr %s777, 256
          %s779 = scalar_lea.vmem [#allocation8], %s778
          %781 = dma.done %s776, 4096
        $region60: #{tpu_custom_call.1} parent=55 // pred_fallthru
          _
      $region56: #{tpu_custom_call.1} parent=5 // pred_fallthru
        _
    $region6: #{tpu_custom_call.1} parent=1 // loop_footer
      %s20 = sadd.s32 1, %s16
    $region7: #{tpu_custom_call.1} parent=1 // loop_footer_branch
      %15 = sbr.rel target = $region3
    $region8: #{tpu_custom_call.1} parent=1 // loop_exit
      _
    %782 = vsyncpa [#allocation4], 1
    %s783 = scalar_lea.sflag [#allocation4], 1
    %784 = vsyncpa %s783, 1
    %785 = vsyncpa [#allocation7], 1
    %786 = vsyncpa [#allocation5], 1
    %s787 = scalar_lea.sflag [#allocation5], 1
    %788 = vsyncpa %s787, 1

</llo_original>
